<compile_context>
chip_gen: v7x
topology: tpu7x:2x2x1
jax: 0.10.0
libtpu: 0.0.40
codegen_flags: <defaults>
</compile_context>

<pallas_src>
import math

import jax
import jax.numpy as jnp
from jax.experimental import pallas as pl
from jax.experimental.pallas import tpu as pltpu


# ---------------------------------------------------------------------------
# Kernel: one (tm, tn) output tile of  y = x @ W + b
# ---------------------------------------------------------------------------
def projection_kernel(x_ref, w_ref, b_ref, o_ref):
    acc = jnp.dot(x_ref[...], w_ref[...], preferred_element_type=jnp.float32)
    o_ref[...] = (acc + b_ref[...].astype(jnp.float32)).astype(o_ref.dtype)


def _pick_tile(dim, target, align):
    """Largest multiple of `align` that divides `dim` and is <= target (else full dim)."""
    if dim <= target:
        return dim
    best = None
    t = align
    while t <= target:
        if dim % t == 0:
            best = t
        t += align
    return best if best is not None else dim


def projection(x, w_t, b, *, tm_target=512, tn_target=512):
    """x: (..., D) fp32; w_t: (D, N) pre-transposed nn.Linear weight; b: (N,)."""
    orig_shape = x.shape
    D = orig_shape[-1]
    N = w_t.shape[1]
    M = 1
    for s in orig_shape[:-1]:
        M *= s

    x2d = x.reshape(M, D)
    b2d = b.reshape(1, N)

    # Tile M (sublane-aligned) and N (lane-aligned); keep K = D untiled.
    tm = _pick_tile(M, tm_target, 8)
    tn = _pick_tile(N, tn_target, 128)

    # Shrink tiles until the double-buffered VMEM footprint fits comfortably
    # (v7x has only 64 MiB physical / 32 MiB default scoped VMEM).
    itemsize = 4
    budget = 28 << 20

    def footprint(tm_, tn_):
        return 2 * (tm_ * D + D * tn_ + tn_ + tm_ * tn_) * itemsize

    while footprint(tm, tn) > budget:
        if tn > 128 and tn % 2 == 0 and (tn // 2) % 128 == 0 and N % (tn // 2) == 0:
            tn //= 2
        elif tm > 8 and tm % 2 == 0 and (tm // 2) % 8 == 0 and M % (tm // 2) == 0:
            tm //= 2
        else:
            break

    grid = (M // tm, N // tn)  # N innermost: x tile stays resident per row-block

    cost = pl.CostEstimate(
        flops=2 * M * D * N,
        transcendentals=0,
        bytes_accessed=itemsize * (M * D + D * N + N + M * N),
    )

    out2d = pl.pallas_call(
        projection_kernel,
        out_shape=jax.ShapeDtypeStruct((M, N), x.dtype),
        grid_spec=pltpu.PrefetchScalarGridSpec(
            num_scalar_prefetch=0,
            grid=grid,
            in_specs=[
                pl.BlockSpec((tm, D), lambda i, j: (i, 0)),   # activations row-tile
                pl.BlockSpec((D, tn), lambda i, j: (0, j)),   # weight col-tile
                pl.BlockSpec((1, tn), lambda i, j: (0, j)),   # bias col-tile
            ],
            out_specs=pl.BlockSpec((tm, tn), lambda i, j: (i, j)),
        ),
        compiler_params=pltpu.CompilerParams(
            dimension_semantics=("parallel", "parallel"),
            vmem_limit_bytes=32 << 20,
        ),
        cost_estimate=cost,
    )(x2d, w_t, b2d)

    return out2d.reshape(*orig_shape[:-1], N)


# ---------------------------------------------------------------------------
# Pure-JAX reference (matches PyTorch nn.Linear forward: x @ W^T + b)
# ---------------------------------------------------------------------------
def reference_forward(x, w_t, b):
    return (
        jnp.einsum("...d,dn->...n", x, w_t, precision=jax.lax.Precision.HIGHEST) + b
    )


if __name__ == "__main__":
    B, S, d_model, vocab_size = 2, 8, 32, 2048

    key = jax.random.PRNGKey(0)
    kx, kw, kb = jax.random.split(key, 3)

    x = jax.random.normal(kx, (B, S, d_model), dtype=jnp.float32)

    # PyTorch nn.Linear init: weight (vocab, d_model), bias (vocab,), U(-1/sqrt(fan_in), +).
    bound = 1.0 / math.sqrt(d_model)
    w = jax.random.uniform(kw, (vocab_size, d_model), jnp.float32, -bound, bound)
    b = jax.random.uniform(kb, (vocab_size,), jnp.float32, -bound, bound)
    w_t = w.T  # store pre-transposed (d_model, vocab_size) so the kernel does x @ W

    out = projection(x, w_t, b)
    out = jax.block_until_ready(out)

    ref = reference_forward(x, w_t, b)
    assert out.shape == (B, S, vocab_size)
    assert jnp.allclose(out, ref, atol=1e-3, rtol=1e-3), "mismatch vs reference"

    print("KERNEL_OK")
</pallas_src>

<mosaic_0001>
module attributes {stable_mosaic.version = 11 : i64} {
  func.func @projection_kernel(%arg0: i32, %arg1: i32, %arg2: memref<16x32xf32, #tpu.memory_space<vmem>>, %arg3: memref<32x512xf32, #tpu.memory_space<vmem>>, %arg4: memref<1x512xf32, #tpu.memory_space<vmem>>, %arg5: memref<16x512xf32, #tpu.memory_space<vmem>>) attributes {dimension_semantics = [#tpu.dimension_semantics<parallel>, #tpu.dimension_semantics<parallel>], iteration_bounds = array<i64: 1, 4>, scalar_prefetch = 0 : i64, scratch_operands = 0 : i64, tpu.core_type = #tpu.core_type<tc>, window_params = [{transform_indices = @transform_0, window_bounds = array<i64: 16, 32>}, {transform_indices = @transform_1, window_bounds = array<i64: 32, 512>}, {transform_indices = @transform_2, window_bounds = array<i64: 1, 512>}, {transform_indices = @transform_3, window_bounds = array<i64: 16, 512>}]} {
    %c0 = arith.constant 0 : index
    %c0_0 = arith.constant 0 : index
    %0 = vector.load %arg2[%c0, %c0_0] : memref<16x32xf32, #tpu.memory_space<vmem>>, vector<16x32xf32>
    %c0_1 = arith.constant 0 : index
    %c0_2 = arith.constant 0 : index
    %1 = vector.load %arg3[%c0_1, %c0_2] : memref<32x512xf32, #tpu.memory_space<vmem>>, vector<32x512xf32>
    %cst = arith.constant dense<0.000000e+00> : vector<16x512xf32>
    %2 = tpu.matmul %0, %1, %cst {dimension_numbers = #tpu.dot_dimension_numbers<[1], [0], [0], [1], [0, 0, 1, 1], [], []>} : vector<16x32xf32>, vector<32x512xf32>, vector<16x512xf32> -> vector<16x512xf32>
    %c0_3 = arith.constant 0 : index
    %c0_4 = arith.constant 0 : index
    %3 = vector.load %arg4[%c0_3, %c0_4] : memref<1x512xf32, #tpu.memory_space<vmem>>, vector<1x512xf32>
    %4 = vector.broadcast %3 : vector<1x512xf32> to vector<16x512xf32>
    %5 = arith.addf %2, %4 : vector<16x512xf32>
    %c0_5 = arith.constant 0 : index
    %c0_6 = arith.constant 0 : index
    %6 = vector.load %arg5[%c0_5, %c0_6] : memref<16x512xf32, #tpu.memory_space<vmem>>, vector<16x512xf32>
    tpu.vector_store %arg5[%c0_5, %c0_6], %5 {strides = array<i32>} : memref<16x512xf32, #tpu.memory_space<vmem>>, vector<16x512xf32>,
    return
  }
  func.func @transform_0(%arg0: i32, %arg1: i32) -> (i32, i32) {
    %c0_i32 = arith.constant 0 : i32
    %c0_i32_0 = arith.constant 0 : i32
    return %arg0, %c0_i32 : i32, i32
  }
  func.func @transform_1(%arg0: i32, %arg1: i32) -> (i32, i32) {
    %c0_i32 = arith.constant 0 : i32
    %c0_i32_0 = arith.constant 0 : i32
    return %c0_i32, %arg1 : i32, i32
  }
  func.func @transform_2(%arg0: i32, %arg1: i32) -> (i32, i32) {
    %c0_i32 = arith.constant 0 : i32
    %c0_i32_0 = arith.constant 0 : i32
    return %c0_i32, %arg1 : i32, i32
  }
  func.func @transform_3(%arg0: i32, %arg1: i32) -> (i32, i32) {
    %c0_i32 = arith.constant 0 : i32
    return %arg0, %arg1 : i32, i32
  }
}

</mosaic_0001>

<llo_original>
// kernel: tpu_custom_call.1
$region0: #{tpu_custom_call.1}
  #allocation0 [shape = 'u32[]', space=smem, size = 0x4, offset = 0x4, fixed_abs, tag = 'smem constant byte address 0x4 - core index']
  #allocation1 [shape = 'u32[144,128]{1,0:T(1,128)}', space=vmem, size = 0x12000, scoped, tag = 'internal scratch']
  %s0 = inlined_call_operand.hbm [shape: f32[16,32], index: 0, kind: input, shape index: {}]
  %s1 = inlined_call_operand.hbm [shape: f32[32,2048], index: 1, kind: input, shape index: {}]
  %s2 = inlined_call_operand.hbm [shape: f32[1,2048], index: 2, kind: input, shape index: {}]
  %s3 = inlined_call_operand.hbm [shape: f32[16,2048], index: 3, kind: output, shape index: {}]
  %s4 = sld [smem:[#allocation0]]
  $region57: #{tpu_custom_call.1} parent=0
    _
  %s6 = ssub.s32 1, %s4
  %s7 = scalar_select 0, %s6, %s4
  $region1: #{tpu_custom_call.1} parent=0
    #allocation2 [shape = 'u8[8192]{0}', space=vmem, size = 0x2000, scoped, tag = 'input window, operand 0, single buffered']
    #allocation3 [shape = 's32[2]{0}', space=sflag, size = 0x8, scoped, tag = 'scoped memory for tpu_custom_call.1']
    #allocation4 [shape = 's32[2]{0}', space=sflag, size = 0x8, scoped, tag = 'scoped memory for tpu_custom_call.1']
    #allocation5 [shape = 'u8[131072]{0}', space=vmem, size = 0x20000, scoped, tag = 'input window, operand 1']
    #allocation6 [shape = 's32[2]{0}', space=sflag, size = 0x8, scoped, tag = 'scoped memory for tpu_custom_call.1']
    #allocation7 [shape = 'u8[4096]{0}', space=vmem, size = 0x1000, scoped, tag = 'input window, operand 2']
    #allocation8 [shape = 'u8[65536]{0}', space=vmem, size = 0x10000, scoped, tag = 'output window, operand 0']
    %8 = vsyncpa [#allocation3], 0
    %9 = vsyncpa [#allocation6], 0
    %s10 = scalar_lea.sflag [#allocation6], 1
    %11 = vsyncpa %s10, 0
    %12 = vsyncpa [#allocation4], 0
    %s13 = scalar_lea.sflag [#allocation4], 1
    %14 = vsyncpa %s13, 0
    loop: start=0, step=1, limit=6
    $region2: #{tpu_custom_call.1} parent=1 // loop_pre_header
      _
    $region3: #{tpu_custom_call.1} parent=1 // loop_header
      %s16 = sphi 0, %s20
      %p17 = scmp.ge.s32.totalorder %s16, 6
      %s23 = sphi 0, %s35
      %s24 = sphi 0, %s31
      %s25 = sphi 0, %s23
      %s26 = sphi 0, %s24
      %s27 = sphi 0, %s25
      %s28 = sphi 0, %s26
      %s38 = sphi 0, %s40
      %s41 = sphi 0, %s38
      %s42 = sphi 0, %s41
      %s58 = sphi 0, %s42
      %s64 = sphi 0, %s66
      %s67 = sphi 0, %s64
      %s68 = sphi 0, %s67
      %s84 = sphi 0, %s68
      %s90 = sphi 0, %s92
      %s93 = sphi 0, %s90
      %s94 = sphi 0, %s93
      %s110 = sphi 0, %s94
      %s118 = sphi 0, %s120
      %s121 = sphi 0, %s118
      %s122 = sphi 0, %s121
      %s138 = sphi 0, %s122
    $region4: #{tpu_custom_call.1} parent=1 // loop_header_branch
      %19 = sbr.rel (%p17) target = $region8
    $region5: #{tpu_custom_call.1} parent=1 // loop_body
      %s21 = ssub.s32 %s16, 1
      %s22 = ssub.s32 %s16, 2
      %s29 = sadd.s32 1, %s24
      %p30 = scmp.ge.s32.totalorder %s29, 4
      %s31 = scalar_select %p30, 0, %s29
      %s32 = sadd.s32 1, %s23
      %s33 = scalar_select %p30, %s32, %s23
      %p34 = scmp.ge.s32.totalorder %s33, 1
      %s35 = scalar_select %p34, 0, %s33
      %s36 = ssub.s32 %s23, %s35
      %p37 = scmp.eq.s32.totalorder %s36, 0
      %s39 = sadd.s32 %s38, 1
      %s40 = scalar_select %p37, %s38, %s39
      %p43 = pneg %p37
      %p44 = scmp.eq.s32.totalorder %s16, 3
      %p45 = por %p43, %p44
      %p46 = scmp.ne.s32.totalorder %s38, %s41
      %p47 = scmp.eq.s32.totalorder %s16, 0
      %p48 = por %p46, %p47
      %p49 = scmp.ne.s32.totalorder %s38, %s41
      %p50 = scmp.eq.s32.totalorder %s21, 3
      %p51 = por %p49, %p50
      %p52 = scmp.ne.s32.totalorder %s41, %s42
      %p53 = scmp.eq.s32.totalorder %s21, 0
      %p54 = por %p52, %p53
      %p55 = scmp.ne.s32.totalorder %s41, %s42
      %p56 = scmp.eq.s32.totalorder %s22, 3
      %p57 = por %p55, %p56
      %p59 = scmp.ne.s32.totalorder %s42, %s58
      %p60 = scmp.eq.s32.totalorder %s22, 0
      %p61 = por %p59, %p60
      %s62 = ssub.s32 %s24, %s31
      %p63 = scmp.eq.s32.totalorder %s62, 0
      %s65 = sadd.s32 %s64, 1
      %s66 = scalar_select %p63, %s64, %s65
      %p69 = pneg %p63
      %p70 = scmp.eq.s32.totalorder %s16, 3
      %p71 = por %p69, %p70
      %p72 = scmp.ne.s32.totalorder %s64, %s67
      %p73 = scmp.eq.s32.totalorder %s16, 0
      %p74 = por %p72, %p73
      %p75 = scmp.ne.s32.totalorder %s64, %s67
      %p76 = scmp.eq.s32.totalorder %s21, 3
      %p77 = por %p75, %p76
      %p78 = scmp.ne.s32.totalorder %s67, %s68
      %p79 = scmp.eq.s32.totalorder %s21, 0
      %p80 = por %p78, %p79
      %p81 = scmp.ne.s32.totalorder %s67, %s68
      %p82 = scmp.eq.s32.totalorder %s22, 3
      %p83 = por %p81, %p82
      %p85 = scmp.ne.s32.totalorder %s68, %s84
      %p86 = scmp.eq.s32.totalorder %s22, 0
      %p87 = por %p85, %p86
      %s88 = ssub.s32 %s24, %s31
      %p89 = scmp.eq.s32.totalorder %s88, 0
      %s91 = sadd.s32 %s90, 1
      %s92 = scalar_select %p89, %s90, %s91
      %p95 = pneg %p89
      %p96 = scmp.eq.s32.totalorder %s16, 3
      %p97 = por %p95, %p96
      %p98 = scmp.ne.s32.totalorder %s90, %s93
      %p99 = scmp.eq.s32.totalorder %s16, 0
      %p100 = por %p98, %p99
      %p101 = scmp.ne.s32.totalorder %s90, %s93
      %p102 = scmp.eq.s32.totalorder %s21, 3
      %p103 = por %p101, %p102
      %p104 = scmp.ne.s32.totalorder %s93, %s94
      %p105 = scmp.eq.s32.totalorder %s21, 0
      %p106 = por %p104, %p105
      %p107 = scmp.ne.s32.totalorder %s93, %s94
      %p108 = scmp.eq.s32.totalorder %s22, 3
      %p109 = por %p107, %p108
      %p111 = scmp.ne.s32.totalorder %s94, %s110
      %p112 = scmp.eq.s32.totalorder %s22, 0
      %p113 = por %p111, %p112
      %s114 = ssub.s32 %s23, %s35
      %s115 = ssub.s32 %s24, %s31
      %s116 = sor.u32 %s114, %s115
      %p117 = scmp.eq.s32.totalorder %s116, 0
      %s119 = sadd.s32 %s118, 1
      %s120 = scalar_select %p117, %s118, %s119
      %p123 = pneg %p117
      %p124 = scmp.eq.s32.totalorder %s16, 3
      %p125 = por %p123, %p124
      %p126 = scmp.ne.s32.totalorder %s118, %s121
      %p127 = scmp.eq.s32.totalorder %s16, 0
      %p128 = por %p126, %p127
      %p129 = scmp.ne.s32.totalorder %s118, %s121
      %p130 = scmp.eq.s32.totalorder %s21, 3
      %p131 = por %p129, %p130
      %p132 = scmp.ne.s32.totalorder %s121, %s122
      %p133 = scmp.eq.s32.totalorder %s21, 0
      %p134 = por %p132, %p133
      %p135 = scmp.ne.s32.totalorder %s121, %s122
      %p136 = scmp.eq.s32.totalorder %s22, 3
      %p137 = por %p135, %p136
      %p139 = scmp.ne.s32.totalorder %s122, %s138
      %p140 = scmp.eq.s32.totalorder %s22, 0
      %p141 = por %p139, %p140
      %p142 = scmp.le.s32.totalorder 1, %s16
      %p143 = scmp.lt.s32.totalorder %s16, 5
      %p144 = pnand %p142, %p143
      %p145 = pneg %p144
      // Predicated region
      $region9: #{tpu_custom_call.1} parent=5 // pred_check
        _
      $region10: #{tpu_custom_call.1} parent=5 // pred_check_branch
        %147 = sbr.rel (%p144) target = $region12
      $region11: #{tpu_custom_call.1} parent=5 // pred_region
        %s148 = ssub.s32 %s16, 1
        // Predicated region
        $region13: #{tpu_custom_call.1} parent=11 // pred_check
          %p149 = pneg %p54
        $region14: #{tpu_custom_call.1} parent=11 // pred_check_branch
          %151 = sbr.rel (%p149) target = $region16
        $region15: #{tpu_custom_call.1} parent=11 // pred_region
          %s152 = smul.u32 2, %s25
          %s154 = ssub.s32 256, 256
          %155 = vsyncadd [#allocation3], %s154
          %s156 = smul.addr %s152, 128
          %s157 = scalar_lea.hbm %s0, %s156
          %s158 = sshll.u32 [#allocation2], 4
          %s159 = int_to_ptr.vmem [resolvable:$true] %s158
          %164 = dma.hbm_to_vmem [thread:$0]  %s157, 256, %s159, [#allocation3], 128, 128, 8
        $region16: #{tpu_custom_call.1} parent=11 // pred_fallthru
          _
      $region12: #{tpu_custom_call.1} parent=5 // pred_fallthru
        _
      %p165 = scmp.lt.s32.totalorder %s16, 4
      // Predicated region
      $region17: #{tpu_custom_call.1} parent=5 // pred_check
        %p166 = pneg %p165
      $region18: #{tpu_custom_call.1} parent=5 // pred_check_branch
        %168 = sbr.rel (%p166) target = $region20
      $region19: #{tpu_custom_call.1} parent=5 // pred_region
        // Predicated region
        $region21: #{tpu_custom_call.1} parent=19 // pred_check
          %p169 = pneg %p74
        $region22: #{tpu_custom_call.1} parent=19 // pred_check_branch
          %171 = sbr.rel (%p169) target = $region24
        $region23: #{tpu_custom_call.1} parent=19 // pred_region
          %s172 = sand.u32 %s16, 1
          %s173 = scalar_lea.sflag [#allocation6], %s172
          %s174 = sand.u32 %s64, 1
          %s175 = smul.addr %s174, 128
          %s176 = scalar_lea.vmem [#allocation5], %s175
          %s177 = smul.u32 4, %s24
          %s179 = ssub.s32 2048, 2048
          %180 = vsyncadd %s173, %s179
          %s181 = smul.addr %s177, 128
          %s182 = scalar_lea.hbm %s1, %s181
          %s183 = sshll.u32 %s176, 4
          %s184 = int_to_ptr.vmem [resolvable:$true] %s183
          %189 = dma.hbm_to_vmem [thread:$0]  %s182, 2048, %s184, %s173, 2048, 512, 32
        $region24: #{tpu_custom_call.1} parent=19 // pred_fallthru
          _
        // Predicated region
        $region25: #{tpu_custom_call.1} parent=19 // pred_check
          %p190 = pneg %p100
        $region26: #{tpu_custom_call.1} parent=19 // pred_check_branch
          %192 = sbr.rel (%p190) target = $region28
        $region27: #{tpu_custom_call.1} parent=19 // pred_region
          %s193 = sand.u32 %s16, 1
          %s194 = scalar_lea.sflag [#allocation6], %s193
          %s195 = sand.u32 %s90, 1
          %s196 = smul.addr %s195, 4
          %s197 = scalar_lea.vmem [#allocation7], %s196
          %s198 = smul.u32 4, %s24
          %s200 = ssub.s32 64, 64
          %201 = vsyncadd %s194, %s200
          %s202 = smul.addr %s198, 16
          %s203 = scalar_lea.hbm %s2, %s202
          %s205 = sshll.u32 %s197, 4
          %s206 = int_to_ptr.vmem [resolvable:$true] %s205
          %208 = dma.hbm_to_vmem [thread:$0]  %s203, 64, %s206, %s194
        $region28: #{tpu_custom_call.1} parent=19 // pred_fallthru
          _
      $region20: #{tpu_custom_call.1} parent=5 // pred_fallthru
        _
      %p209 = scmp.le.s32.totalorder 1, %s16
      %p210 = scmp.lt.s32.totalorder %s16, 5
      %p211 = pnand %p209, %p210
      %p212 = pneg %p211
      // Predicated region
      $region29: #{tpu_custom_call.1} parent=5 // pred_check
        _
      $region30: #{tpu_custom_call.1} parent=5 // pred_check_branch
        %214 = sbr.rel (%p211) target = $region32
      $region31: #{tpu_custom_call.1} parent=5 // pred_region
        %s215 = ssub.s32 %s16, 1
        // Predicated region
        $region33: #{tpu_custom_call.1} parent=31 // pred_check
          %p216 = pneg %p54
        $region34: #{tpu_custom_call.1} parent=31 // pred_check_branch
          %218 = sbr.rel (%p216) target = $region36
        $region35: #{tpu_custom_call.1} parent=31 // pred_region
          %219 = dma.done [#allocation3], 256
        $region36: #{tpu_custom_call.1} parent=31 // pred_fallthru
          _
        %s220 = sand.u32 %s21, 1
        %s221 = scalar_lea.sflag [#allocation6], %s220
        %s222 = sand.u32 %s67, 1
        %s223 = smul.addr %s222, 128
        %s224 = scalar_lea.vmem [#allocation5], %s223
        // Predicated region
        $region37: #{tpu_custom_call.1} parent=31 // pred_check
          %p225 = pneg %p80
        $region38: #{tpu_custom_call.1} parent=31 // pred_check_branch
          %227 = sbr.rel (%p225) target = $region40
        $region39: #{tpu_custom_call.1} parent=31 // pred_region
          %228 = dma.done %s221, 2048
        $region40: #{tpu_custom_call.1} parent=31 // pred_fallthru
          _
        %s229 = sand.u32 %s21, 1
        %s230 = scalar_lea.sflag [#allocation6], %s229
        %s231 = sand.u32 %s93, 1
        %s232 = smul.addr %s231, 4
        %s233 = scalar_lea.vmem [#allocation7], %s232
        // Predicated region
        $region41: #{tpu_custom_call.1} parent=31 // pred_check
          %p234 = pneg %p106
        $region42: #{tpu_custom_call.1} parent=31 // pred_check_branch
          %236 = sbr.rel (%p234) target = $region44
        $region43: #{tpu_custom_call.1} parent=31 // pred_region
          %237 = dma.done %s230, 64
        $region44: #{tpu_custom_call.1} parent=31 // pred_fallthru
          _
        %p238 = pneg %p54
        %p239 = pneg %p51
        %s240 = sand.u32 %s21, 1
        %s241 = scalar_lea.sflag [#allocation6], %s240
        %s242 = sand.u32 %s67, 1
        %s243 = smul.addr %s242, 128
        %s244 = scalar_lea.vmem [#allocation5], %s243
        %p245 = pneg %p80
        %p246 = pneg %p77
        %s247 = sand.u32 %s21, 1
        %s248 = scalar_lea.sflag [#allocation6], %s247
        %s249 = sand.u32 %s93, 1
        %s250 = smul.addr %s249, 4
        %s251 = scalar_lea.vmem [#allocation7], %s250
        %p252 = pneg %p106
        %p253 = pneg %p103
        %p254 = pneg %p134
        %p255 = pneg %p131
        %s256 = sand.u32 %s121, 1
        %s257 = scalar_lea.sflag [#allocation4], %s256
        %s258 = sand.u32 %s121, 1
        %s259 = smul.addr %s258, 64
        %s260 = scalar_lea.vmem [#allocation8], %s259
        %s261 = smul.u32 2, %s25
        %s262 = smul.u32 4, %s26
        %s263 = smul.u32 4, %s26
        %s264 = smul.u32 2, %s25
        %s265 = smul.u32 4, %s26
        %v266 = vld [vmem:[#allocation2] sm:$0xff]
        %v267 = vld [vmem:[#allocation2 + $0x8] sm:$0xff]
        %v268 = vld [vmem:[%s224] sm:$0xff]
        %v269 = vld [vmem:[%s224 + $0x8] sm:$0xff]
        %v270 = vld [vmem:[%s224 + $0x10] sm:$0xff]
        %v271 = vld [vmem:[%s224 + $0x18] sm:$0xff]
        %v272 = vld [vmem:[%s224 + $0x20] sm:$0xff]
        %v273 = vld [vmem:[%s224 + $0x28] sm:$0xff]
        %v274 = vld [vmem:[%s224 + $0x30] sm:$0xff]
        %v275 = vld [vmem:[%s224 + $0x38] sm:$0xff]
        %v276 = vld [vmem:[%s224 + $0x40] sm:$0xff]
        %v277 = vld [vmem:[%s224 + $0x48] sm:$0xff]
        %v278 = vld [vmem:[%s224 + $0x50] sm:$0xff]
        %v279 = vld [vmem:[%s224 + $0x58] sm:$0xff]
        %v280 = vld [vmem:[%s224 + $0x60] sm:$0xff]
        %v281 = vld [vmem:[%s224 + $0x68] sm:$0xff]
        %v282 = vld [vmem:[%s224 + $0x70] sm:$0xff]
        %v283 = vld [vmem:[%s224 + $0x78] sm:$0xff]
        %v284 = vld [vmem:[%s233] sm:$0xf]
        %v286 = vlaneseq
        %v287 = vshrl.u32 %v286, 7
        %v288 = vsub.s32 0, %v287
        %v289 = vrot.slane %v284, %v288
        %v290 = vlaneseq
        %v291 = vshrl.u32 %v290, 7
        %v292 = vsub.s32 1, %v291
        %v293 = vrot.slane %v284, %v292
        %v294 = vlaneseq
        %v295 = vshrl.u32 %v294, 7
        %v296 = vsub.s32 2, %v295
        %v297 = vrot.slane %v284, %v296
        %v298 = vlaneseq
        %v299 = vshrl.u32 %v298, 7
        %v300 = vsub.s32 3, %v299
        %v301 = vrot.slane %v284, %v300
        %vm306 = vcmask 261120
        %v308 = vsel %vm306, %v266, 0
        %v311 = vsel %vm306, %v267, 0
        %313 = vmatprep.subr.mxu0 %v269
        %314 = vmatpush1.msra.mxu0 %v268
        %315 = vmatprep.subr.mxu0 %v273
        %316 = vmatpush1.msra.mxu0 %v272
        %317 = vmatprep.subr.mxu0 %v277
        %318 = vmatpush1.msra.mxu0 %v276
        %319 = vmatprep.subr.mxu0 %v281
        %320 = vmatpush1.msra.mxu0 %v280
        %321 = vmatprep.subr.mxu0 0.0
        %322 = vmatpush1.msra.mxu0 0.0
        %323 = vmatprep.subr.mxu0 0.0
        %324 = vmatpush1.msra.mxu0 0.0
        %325 = vmatprep.subr.mxu0 0.0
        %326 = vmatpush1.msra.mxu0 0.0
        %327 = vmatprep.subr.mxu0 0.0
        %328 = vmatpush1.msra.mxu0 0.0
        %329 = vmatprep.subr.mxu0 0.0
        %330 = vmatpush1.msra.mxu0 0.0
        %331 = vmatprep.subr.mxu0 0.0
        %332 = vmatpush1.msra.mxu0 0.0
        %333 = vmatprep.subr.mxu0 0.0
        %334 = vmatpush1.msra.mxu0 0.0
        %335 = vmatprep.subr.mxu0 0.0
        %336 = vmatpush1.msra.mxu0 0.0
        %337 = vmatprep.subr.mxu0 0.0
        %338 = vmatpush1.msra.mxu0 0.0
        %339 = vmatprep.subr.mxu0 0.0
        %340 = vmatpush1.msra.mxu0 0.0
        %341 = vmatprep.subr.mxu0 0.0
        %342 = vmatpush1.msra.mxu0 0.0
        %343 = vmatprep.subr.mxu0 0.0
        %344 = vmatpush1.msra.mxu0 0.0
        %345 = vmatprep.subr.mxu0 0.0
        %346 = vmatpush1.msra.mxu0 0.0
        %347 = vmatprep.subr.mxu0 0.0
        %348 = vmatpush1.msra.mxu0 0.0
        %349 = vmatprep.subr.mxu0 0.0
        %350 = vmatpush1.msra.mxu0 0.0
        %351 = vmatprep.subr.mxu0 0.0
        %352 = vmatpush1.msra.mxu0 0.0
        %353 = vmatprep.subr.mxu0 0.0
        %354 = vmatpush1.msra.mxu0 0.0
        %355 = vmatprep.subr.mxu0 0.0
        %356 = vmatpush1.msra.mxu0 0.0
        %357 = vmatprep.subr.mxu0 0.0
        %358 = vmatpush1.msra.mxu0 0.0
        %359 = vmatprep.subr.mxu0 0.0
        %360 = vmatpush1.msra.mxu0 0.0
        %361 = vmatprep.subr.mxu0 0.0
        %362 = vmatpush1.msra.mxu0 0.0
        %363 = vmatprep.subr.mxu0 0.0
        %364 = vmatpush1.msra.mxu0 0.0
        %365 = vmatprep.subr.mxu0 0.0
        %366 = vmatpush1.msra.mxu0 0.0
        %367 = vmatprep.subr.mxu0 0.0
        %368 = vmatpush1.msra.mxu0 0.0
        %369 = vmatprep.subr.mxu0 0.0
        %370 = vmatpush1.msra.mxu0 0.0
        %371 = vmatprep.subr.mxu0 0.0
        %372 = vmatpush1.msra.mxu0 0.0
        %373 = vmatprep.subr.mxu0 0.0
        %374 = vmatpush1.msra.mxu0 0.0
        %375 = vmatprep.subr.mxu0 0.0
        %376 = vmatpush1.msra.mxu0 0.0
        %377 = vmatprep.mubr.f32.mxu0 0.0
        %378 = vmatmul.mubr.f32.gmra.mrb[0].mxu0 %v308
        %v379 = vpop.f32.mrb[0].mxu0
        %v380 = vadd.f32 %v289, %v379
        %v381 = vpop.f32.mrb[0].mxu0
        %v382 = vadd.f32 %v293, %v381
        %383 = vmatprep.mubr.f32.mxu0 0.0
        %384 = vmatmul.mubr.f32.gmra.mrb[0].mxu0 %v311
        %v385 = vpop.f32.mrb[0].mxu0
        %v386 = vadd.f32 %v289, %v385
        %v387 = vpop.f32.mrb[0].mxu0
        %v388 = vadd.f32 %v293, %v387
        %389 = vdwg.mxu0
        %390 = vmatprep.subr.mxu0 %v271
        %391 = vmatpush1.msra.mxu0 %v270
        %392 = vmatprep.subr.mxu0 %v275
        %393 = vmatpush1.msra.mxu0 %v274
        %394 = vmatprep.subr.mxu0 %v279
        %395 = vmatpush1.msra.mxu0 %v278
        %396 = vmatprep.subr.mxu0 %v283
        %397 = vmatpush1.msra.mxu0 %v282
        %398 = vmatprep.subr.mxu0 0.0
        %399 = vmatpush1.msra.mxu0 0.0
        %400 = vmatprep.subr.mxu0 0.0
        %401 = vmatpush1.msra.mxu0 0.0
        %402 = vmatprep.subr.mxu0 0.0
        %403 = vmatpush1.msra.mxu0 0.0
        %404 = vmatprep.subr.mxu0 0.0
        %405 = vmatpush1.msra.mxu0 0.0
        %406 = vmatprep.subr.mxu0 0.0
        %407 = vmatpush1.msra.mxu0 0.0
        %408 = vmatprep.subr.mxu0 0.0
        %409 = vmatpush1.msra.mxu0 0.0
        %410 = vmatprep.subr.mxu0 0.0
        %411 = vmatpush1.msra.mxu0 0.0
        %412 = vmatprep.subr.mxu0 0.0
        %413 = vmatpush1.msra.mxu0 0.0
        %414 = vmatprep.subr.mxu0 0.0
        %415 = vmatpush1.msra.mxu0 0.0
        %416 = vmatprep.subr.mxu0 0.0
        %417 = vmatpush1.msra.mxu0 0.0
        %418 = vmatprep.subr.mxu0 0.0
        %419 = vmatpush1.msra.mxu0 0.0
        %420 = vmatprep.subr.mxu0 0.0
        %421 = vmatpush1.msra.mxu0 0.0
        %422 = vmatprep.subr.mxu0 0.0
        %423 = vmatpush1.msra.mxu0 0.0
        %424 = vmatprep.subr.mxu0 0.0
        %425 = vmatpush1.msra.mxu0 0.0
        %426 = vmatprep.subr.mxu0 0.0
        %427 = vmatpush1.msra.mxu0 0.0
        %428 = vmatprep.subr.mxu0 0.0
        %429 = vmatpush1.msra.mxu0 0.0
        %430 = vmatprep.subr.mxu0 0.0
        %431 = vmatpush1.msra.mxu0 0.0
        %432 = vmatprep.subr.mxu0 0.0
        %433 = vmatpush1.msra.mxu0 0.0
        %434 = vmatprep.subr.mxu0 0.0
        %435 = vmatpush1.msra.mxu0 0.0
        %436 = vmatprep.subr.mxu0 0.0
        %437 = vmatpush1.msra.mxu0 0.0
        %438 = vmatprep.subr.mxu0 0.0
        %439 = vmatpush1.msra.mxu0 0.0
        %440 = vmatprep.subr.mxu0 0.0
        %441 = vmatpush1.msra.mxu0 0.0
        %442 = vmatprep.subr.mxu0 0.0
        %443 = vmatpush1.msra.mxu0 0.0
        %444 = vmatprep.subr.mxu0 0.0
        %445 = vmatpush1.msra.mxu0 0.0
        %446 = vmatprep.subr.mxu0 0.0
        %447 = vmatpush1.msra.mxu0 0.0
        %448 = vmatprep.subr.mxu0 0.0
        %449 = vmatpush1.msra.mxu0 0.0
        %450 = vmatprep.subr.mxu0 0.0
        %451 = vmatpush1.msra.mxu0 0.0
        %452 = vmatprep.subr.mxu0 0.0
        %453 = vmatpush1.msra.mxu0 0.0
        %454 = vmatprep.mubr.f32.mxu0 0.0
        %455 = vmatmul.mubr.f32.gmra.mrb[0].mxu0 %v308
        %v456 = vpop.f32.mrb[0].mxu0
        %v457 = vadd.f32 %v297, %v456
        %v458 = vpop.f32.mrb[0].mxu0
        %v459 = vadd.f32 %v301, %v458
        %460 = vmatprep.mubr.f32.mxu0 0.0
        %461 = vmatmul.mubr.f32.gmra.mrb[0].mxu0 %v311
        %v462 = vpop.f32.mrb[0].mxu0
        %v463 = vadd.f32 %v297, %v462
        %v464 = vpop.f32.mrb[0].mxu0
        %v465 = vadd.f32 %v301, %v464
        %466 = vdwg.mxu0
        %467 = vst [vmem:[%s260] sm:$0xff] %v380
        %468 = vst [vmem:[%s260 + $0x8] sm:$0xff] %v382
        %469 = vst [vmem:[%s260 + $0x10] sm:$0xff] %v457
        %470 = vst [vmem:[%s260 + $0x18] sm:$0xff] %v459
        %471 = vst [vmem:[%s260 + $0x20] sm:$0xff] %v386
        %472 = vst [vmem:[%s260 + $0x28] sm:$0xff] %v388
        %473 = vst [vmem:[%s260 + $0x30] sm:$0xff] %v463
        %474 = vst [vmem:[%s260 + $0x38] sm:$0xff] %v465
        %s475 = sand.u32 %s121, 1
        %s476 = scalar_lea.sflag [#allocation4], %s475
        %s477 = sand.u32 %s121, 1
        %s478 = smul.addr %s477, 64
        %s479 = scalar_lea.vmem [#allocation8], %s478
        // Predicated region
        $region45: #{tpu_custom_call.1} parent=31 // pred_check
          %p480 = pneg %p131
        $region46: #{tpu_custom_call.1} parent=31 // pred_check_branch
          %482 = sbr.rel (%p480) target = $region48
        $region47: #{tpu_custom_call.1} parent=31 // pred_region
          %s483 = smul.u32 2, %s25
          %s484 = smul.u32 4, %s26
          %s486 = ssub.s32 1024, 1024
          %487 = vsyncadd %s476, %s486
          %s488 = smul.addr %s483, 16
          %s489 = sadd.s32 %s484, %s488
          %s490 = smul.addr %s489, 128
          %s491 = scalar_lea.hbm %s3, %s490
          %s492 = sshll.u32 %s479, 4
          %s493 = int_to_ptr.vmem [resolvable:$true] %s492
          %498 = dma.vmem_to_hbm [thread:$0]  %s493, 1024, %s491, %s476, 512, 2048, 32
        $region48: #{tpu_custom_call.1} parent=31 // pred_fallthru
          _
      $region32: #{tpu_custom_call.1} parent=5 // pred_fallthru
        _
      %p499 = scmp.le.s32.totalorder 2, %s16
      // Predicated region
      $region49: #{tpu_custom_call.1} parent=5 // pred_check
        %p500 = pneg %p499
      $region50: #{tpu_custom_call.1} parent=5 // pred_check_branch
        %502 = sbr.rel (%p500) target = $region52
      $region51: #{tpu_custom_call.1} parent=5 // pred_region
        %s503 = ssub.s32 %s16, 2
        // Predicated region
        $region53: #{tpu_custom_call.1} parent=51 // pred_check
          %p504 = pneg %p137
        $region54: #{tpu_custom_call.1} parent=51 // pred_check_branch
          %506 = sbr.rel (%p504) target = $region56
        $region55: #{tpu_custom_call.1} parent=51 // pred_region
          %s507 = sand.u32 %s122, 1
          %s508 = scalar_lea.sflag [#allocation4], %s507
          %s509 = sand.u32 %s122, 1
          %s510 = smul.addr %s509, 64
          %s511 = scalar_lea.vmem [#allocation8], %s510
          %512 = dma.done %s508, 1024
        $region56: #{tpu_custom_call.1} parent=51 // pred_fallthru
          _
      $region52: #{tpu_custom_call.1} parent=5 // pred_fallthru
        _
    $region6: #{tpu_custom_call.1} parent=1 // loop_footer
      %s20 = sadd.s32 1, %s16
    $region7: #{tpu_custom_call.1} parent=1 // loop_footer_branch
      %15 = sbr.rel target = $region3
    $region8: #{tpu_custom_call.1} parent=1 // loop_exit
      _
    %513 = vsyncpa [#allocation3], 1
    %s514 = scalar_lea.sflag [#allocation3], 1
    %515 = vsyncpa %s514, 1
    %516 = vsyncpa [#allocation6], 1
    %s517 = scalar_lea.sflag [#allocation6], 1
    %518 = vsyncpa %s517, 1
    %519 = vsyncpa [#allocation4], 1
    %s520 = scalar_lea.sflag [#allocation4], 1
    %521 = vsyncpa %s520, 1

</llo_original>
